<compile_context>
chip_gen: v6e
topology: v6e:2x2x1
jax: 0.10.0
libtpu: 0.0.40
codegen_flags: <defaults>
</compile_context>

<pallas_src>
import functools

import jax
import jax.numpy as jnp
from jax import lax
from jax.experimental import pallas as pl
from jax.experimental.pallas import tpu as pltpu

IGNORE_INDEX = -100  # PyTorch nn.NLLLoss default


def _nll_partial_kernel(logits_ref, labels_ref, tot_ref, *, n_rows):
    """One (TN, TC) tile: accumulate the partial sum of picked log-probs for
    this row block into its (1, 8, 128) resident output tile."""
    i = pl.program_id(0)  # row-block index   (parallel)
    j = pl.program_id(1)  # class-block index (reduction, innermost)

    logits = logits_ref[...]        # (TN, TC), native dtype (bf16 stays bf16)
    labels = labels_ref[...]        # (TN, 1) int32
    tn, tc = logits.shape

    # All j-dependent / masking work happens on (TN,1) vectors: fold the
    # class-block offset and the row-validity mask into the label itself.
    # ignore_index (-100), labels belonging to other class blocks and padded
    # rows all end up outside [0, tc) and can never match the column iota.
    row_ids = i * tn + lax.broadcasted_iota(jnp.int32, (tn, 1), 0)   # (TN, 1)
    local_label = jnp.where(row_ids < n_rows, labels - j * tc, -1)   # (TN, 1)

    col = lax.broadcasted_iota(jnp.int32, (tn, tc), 1)               # j-independent
    onehot = col == local_label                                      # (TN, TC) cmp

    @pl.when(j == 0)
    def _init():
        tot_ref[...] = jnp.zeros_like(tot_ref)

    # Select in the native dtype; the per-row lane reduce is exact because at
    # most one element per row is non-zero, so only the (TN,1) row sums need
    # the f32 upcast before the cross-row accumulation.
    picked = jnp.where(onehot, logits, jnp.zeros((), logits.dtype))  # (TN, TC)
    row_sum = jnp.sum(picked, axis=1, keepdims=True).astype(jnp.float32)

    # Output block index is constant across j -> block stays VMEM-resident
    # across the class reduction; every element holds the running sum.
    tot_ref[...] += jnp.sum(row_sum)


def _target_tile_bytes():
    """Per-logits-tile budget: bigger on v7x (3.2 TB/s HBM makes the ~0.35 us
    per-grid-step overhead expensive), ~6 MiB elsewhere (v6e plateaus by then)."""
    try:
        info = pltpu.get_tpu_info()
        vmem = getattr(info, "vmem_capacity_bytes", None)
        if vmem is not None and vmem <= 80 * 1024 * 1024:   # v7x: 64 MiB VMEM
            return 12 * 1024 * 1024
    except Exception:
        pass
    return 6 * 1024 * 1024


def _choose_tiles(n, c, itemsize):
    """Pick (TN, TC): lane-dense class blocks, row blocks aligned to the
    dtype's sublane packing, >=2 row blocks when possible (v7x megacore)."""
    row_align = max(8, 32 // itemsize)   # f32: 8, bf16: 16, int8/fp8: 32

    if c <= 4096:
        tc = c            # full class dim in one lane-dense block
    else:
        tc = 512          # multiple of 128; class axis gets its own grid dim

    target_bytes = _target_tile_bytes()
    tn = (target_bytes // (tc * itemsize)) // row_align * row_align
    tn = int(max(row_align, min(2048, tn)))

    if tn >= n:
        # Prefer two row blocks so v7x's second TensorCore has work, but only
        # when each half still respects the dtype's minimum sublane tile.
        half = pl.cdiv(n, 2)
        half = pl.cdiv(half, row_align) * row_align
        tn = half if half < n else n
    return tn, tc


def nll_loss(logits: jax.Array, labels: jax.Array, *,
             block_rows=None, block_classes=None) -> jax.Array:
    """Equivalent of torch.nn.NLLLoss()(logits, labels) for 2-D logits
    (mean reduction, ignore_index=-100, no class weights)."""
    assert logits.ndim == 2, "expects (N, C) log-probabilities"
    n, c = logits.shape
    labels_i32 = labels.astype(jnp.int32)
    labels_2d = labels_i32.reshape(n, 1)

    itemsize = jnp.dtype(logits.dtype).itemsize
    tn, tc = _choose_tiles(n, c, itemsize)
    if block_rows is not None:
        tn = int(block_rows)       # caller override (must respect dtype tiling)
    if block_classes is not None:
        tc = int(block_classes)

    nr = pl.cdiv(n, tn)   # row blocks   (parallel -> both TCs on v7x)
    nc = pl.cdiv(c, tc)   # class blocks (reduction, innermost)

    kernel = functools.partial(_nll_partial_kernel, n_rows=n)

    out_t = pl.pallas_call(
        kernel,
        out_shape=jax.ShapeDtypeStruct((nr, 8, 128), jnp.float32),  # partial totals
        grid=(nr, nc),
        in_specs=[
            pl.BlockSpec((tn, tc), lambda i, j: (i, j)),  # logits, native dtype
            pl.BlockSpec((tn, 1), lambda i, j: (i, 0)),   # labels reused over j
        ],
        out_specs=pl.BlockSpec((1, 8, 128), lambda i, j: (i, 0, 0)),
        compiler_params=pltpu.CompilerParams(
            dimension_semantics=("parallel", "arbitrary"),
            vmem_limit_bytes=48 * 1024 * 1024),
    )(logits, labels_2d)

    total = jnp.sum(out_t[:, 0, 0])
    # Valid-row count is a trivial O(N) reduction; plain XLA does it for free.
    count = jnp.sum((labels_i32 != IGNORE_INDEX).astype(jnp.float32))
    # NOTE: if every label == ignore_index this is NaN (0/0), matching PyTorch.
    # TODO(synk): class weights / reduction='sum'|'none' variants not supported.
    return -total / count


if __name__ == "__main__":
    key = jax.random.PRNGKey(0)
    k_logit, k_label = jax.random.split(key)

    # Primary small shape: batch=8 samples, 32 classes.
    N, C = 8, 32
    raw = jax.random.normal(k_logit, (N, C), dtype=jnp.float32)
    logits = jax.nn.log_softmax(raw, axis=-1)          # NLLLoss expects log-probs
    labels = jax.random.randint(k_label, (N,), 0, C, dtype=jnp.int32)

    loss = nll_loss(logits, labels)
    jax.block_until_ready(loss)
    ref = -jnp.mean(logits[jnp.arange(N), labels])
    assert jnp.allclose(loss, ref, atol=1e-5, rtol=1e-5), (loss, ref)

    # bf16 logits go into the kernel in native dtype (half the HBM traffic).
    logits_bf16 = logits.astype(jnp.bfloat16)
    loss_bf16 = nll_loss(logits_bf16, labels)
    ref_bf16 = -jnp.mean(logits_bf16.astype(jnp.float32)[jnp.arange(N), labels])
    assert jnp.allclose(loss_bf16, ref_bf16, atol=1e-4, rtol=1e-4), (loss_bf16, ref_bf16)

    # ignore_index handling (excluded from sum and count).
    labels_ig = labels.at[3].set(IGNORE_INDEX)
    loss_ig = nll_loss(logits, labels_ig)
    mask = labels_ig != IGNORE_INDEX
    picked = logits[jnp.arange(N), jnp.clip(labels_ig, 0, C - 1)]
    ref_ig = -(jnp.sum(jnp.where(mask, picked, 0.0)) / jnp.sum(mask))
    assert jnp.allclose(loss_ig, ref_ig, atol=1e-5, rtol=1e-5), (loss_ig, ref_ig)

    # Explicit multi-block grid path (2 row blocks x 2 class blocks).
    N2, C2 = 16, 256
    k3, k4 = jax.random.split(k_logit)
    raw2 = jax.random.normal(k3, (N2, C2), dtype=jnp.float32)
    logits2 = jax.nn.log_softmax(raw2, axis=-1)
    labels2 = jax.random.randint(k4, (N2,), 0, C2, dtype=jnp.int32)
    loss2 = nll_loss(logits2, labels2, block_rows=8, block_classes=128)
    ref2 = -jnp.mean(logits2[jnp.arange(N2), labels2])
    assert jnp.allclose(loss2, ref2, atol=1e-5, rtol=1e-5), (loss2, ref2)

    # Auto-tiling path with >=2 row blocks and a partial edge row block.
    N3, C3 = 24, 64
    k5, k6 = jax.random.split(k_label)
    raw3 = jax.random.normal(k5, (N3, C3), dtype=jnp.float32)
    logits3 = jax.nn.log_softmax(raw3, axis=-1)
    labels3 = jax.random.randint(k6, (N3,), 0, C3, dtype=jnp.int32)
    loss3 = nll_loss(logits3, labels3)
    ref3 = -jnp.mean(logits3[jnp.arange(N3), labels3])
    assert jnp.allclose(loss3, ref3, atol=1e-5, rtol=1e-5), (loss3, ref3)

    jax.block_until_ready((loss, loss_bf16, loss_ig, loss2, loss3))
    print("KERNEL_OK")
</pallas_src>

<mosaic_0001>
module attributes {stable_mosaic.version = 11 : i64} {
  func.func @_nll_partial_kernel(%arg0: i32, %arg1: i32, %arg2: memref<8x32xf32, #tpu.memory_space<vmem>>, %arg3: memref<8x1xi32, #tpu.memory_space<vmem>>, %arg4: memref<1x8x128xf32, #tpu.memory_space<vmem>>) attributes {dimension_semantics = [#tpu.dimension_semantics<parallel>, #tpu.dimension_semantics<arbitrary>], iteration_bounds = array<i64: 1, 1>, scalar_prefetch = 0 : i64, scratch_operands = 0 : i64, tpu.core_type = #tpu.core_type<tc>, window_params = [{transform_indices = @transform_0, window_bounds = array<i64: 8, 32>}, {transform_indices = @transform_1, window_bounds = array<i64: 8, 1>}, {transform_indices = @transform_2, window_bounds = array<i64: 1, 8, 128>}]} {
    %c0 = arith.constant 0 : index
    %c0_0 = arith.constant 0 : index
    %0 = vector.load %arg2[%c0, %c0_0] : memref<8x32xf32, #tpu.memory_space<vmem>>, vector<8x32xf32>
    %c0_1 = arith.constant 0 : index
    %c0_2 = arith.constant 0 : index
    %1 = vector.load %arg3[%c0_1, %c0_2] : memref<8x1xi32, #tpu.memory_space<vmem>>, vector<8x1xi32>
    %c8_i32 = arith.constant 8 : i32
    %2 = arith.muli %arg0, %c8_i32 : i32
    %3 = tpu.iota {dimensions = array<i32: 0>} : vector<8x1xi32>
    %4 = vector.broadcast %2 : i32 to vector<8x1xi32>
    %5 = arith.addi %4, %3 : vector<8x1xi32>
    %c8_i32_3 = arith.constant 8 : i32
    %6 = vector.broadcast %c8_i32_3 : i32 to vector<8x1xi32>
    %7 = arith.cmpi slt, %5, %6 : vector<8x1xi32>
    %c32_i32 = arith.constant 32 : i32
    %8 = arith.muli %arg1, %c32_i32 : i32
    %9 = vector.broadcast %8 : i32 to vector<8x1xi32>
    %10 = arith.subi %1, %9 : vector<8x1xi32>
    %c-1_i32 = arith.constant -1 : i32
    %11 = vector.broadcast %c-1_i32 : i32 to vector<8x1xi32>
    %12 = arith.select %7, %10, %11 : vector<8x1xi1>, vector<8x1xi32>
    %13 = tpu.iota {dimensions = array<i32: 1>} : vector<8x32xi32>
    %14 = vector.broadcast %12 : vector<8x1xi32> to vector<8x32xi32>
    %15 = arith.cmpi eq, %13, %14 : vector<8x32xi32>
    %c0_i32 = arith.constant 0 : i32
    %16 = arith.cmpi eq, %arg1, %c0_i32 : i32
    %17 = arith.extui %16 : i1 to i32
    %c0_i32_4 = arith.constant 0 : i32
    %18 = arith.cmpi ne, %17, %c0_i32_4 : i32
    scf.if %18 {
      %cst_13 = arith.constant 0.000000e+00 : f32
      %31 = vector.broadcast %cst_13 : f32 to vector<1x8x128xf32>
      %c0_14 = arith.constant 0 : index
      %c0_15 = arith.constant 0 : index
      %c0_16 = arith.constant 0 : index
      %32 = vector.load %arg4[%c0_14, %c0_15, %c0_16] : memref<1x8x128xf32, #tpu.memory_space<vmem>>, vector<1x8x128xf32>
      tpu.vector_store %arg4[%c0_14, %c0_15, %c0_16], %31 {strides = array<i32>} : memref<1x8x128xf32, #tpu.memory_space<vmem>>, vector<1x8x128xf32>,
    } else {
    }
    %cst = arith.constant 0.000000e+00 : f32
    %19 = vector.broadcast %cst : f32 to vector<8x32xf32>
    %20 = arith.select %15, %0, %19 : vector<8x32xi1>, vector<8x32xf32>
    %cst_5 = arith.constant dense<0.000000e+00> : vector<8xf32>
    %21 = vector.multi_reduction <add>, %20, %cst_5 [1] : vector<8x32xf32> to vector<8xf32>
    %22 = vector.shape_cast %21 : vector<8xf32> to vector<8x1xf32>
    %c0_6 = arith.constant 0 : index
    %c0_7 = arith.constant 0 : index
    %c0_8 = arith.constant 0 : index
    %23 = vector.load %arg4[%c0_6, %c0_7, %c0_8] : memref<1x8x128xf32, #tpu.memory_space<vmem>>, vector<1x8x128xf32>
    %24 = vector.shape_cast %22 : vector<8x1xf32> to vector<1x8x1xf32>
    %cst_9 = arith.constant dense<0.000000e+00> : vector<1xf32>
    %25 = vector.multi_reduction <add>, %24, %cst_9 [1, 2] : vector<1x8x1xf32> to vector<1xf32>
    %26 = vector.shape_cast %25 : vector<1xf32> to vector<1x1x1xf32>
    %27 = vector.extract %26[0, 0, 0] : f32 from vector<1x1x1xf32>
    %28 = vector.broadcast %27 : f32 to vector<1x8x128xf32>
    %29 = arith.addf %23, %28 : vector<1x8x128xf32>
    %c0_10 = arith.constant 0 : index
    %c0_11 = arith.constant 0 : index
    %c0_12 = arith.constant 0 : index
    %30 = vector.load %arg4[%c0_10, %c0_11, %c0_12] : memref<1x8x128xf32, #tpu.memory_space<vmem>>, vector<1x8x128xf32>
    tpu.vector_store %arg4[%c0_10, %c0_11, %c0_12], %29 {strides = array<i32>} : memref<1x8x128xf32, #tpu.memory_space<vmem>>, vector<1x8x128xf32>,
    return
  }
  func.func @transform_0(%arg0: i32, %arg1: i32) -> (i32, i32) {
    %c0_i32 = arith.constant 0 : i32
    return %arg0, %arg1 : i32, i32
  }
  func.func @transform_1(%arg0: i32, %arg1: i32) -> (i32, i32) {
    %c0_i32 = arith.constant 0 : i32
    %c0_i32_0 = arith.constant 0 : i32
    return %arg0, %c0_i32 : i32, i32
  }
  func.func @transform_2(%arg0: i32, %arg1: i32) -> (i32, i32, i32) {
    %c0_i32 = arith.constant 0 : i32
    %c0_i32_0 = arith.constant 0 : i32
    %c0_i32_1 = arith.constant 0 : i32
    return %arg0, %c0_i32, %c0_i32_0 : i32, i32, i32
  }
}

</mosaic_0001>

<llo_original>
// kernel: tpu_custom_call.1
$region0: #{tpu_custom_call.1}
  #allocation0 [shape = 'u32[]', space=smem, size = 0x4, offset = 0x4, fixed_abs, tag = 'smem constant byte address 0x4 - core index']
  #allocation1 [shape = 'u32[144,128]{1,0:T(1,128)}', space=vmem, size = 0x12000, scoped, tag = 'internal scratch']
  %s0 = inlined_call_operand.vmem [shape: f32[8,32], index: 0, kind: input, shape index: {}]
  %s1 = inlined_call_operand.vmem [shape: s32[8,1], index: 1, kind: input, shape index: {}]
  %s2 = inlined_call_operand.hbm [shape: f32[1,8,128], index: 2, kind: output, shape index: {}]
  %s3 = sld [smem:[#allocation0]]
  $region22: #{tpu_custom_call.1} parent=0
    _
  %s5 = ssub.s32 1, %s3
  %s6 = scalar_select 0, %s5, %s3
  $region1: #{tpu_custom_call.1} parent=0
    #allocation2 [shape = 'u8[4096]{0}', space=vmem, size = 0x1000, scoped, tag = 'output window, operand 0, single buffered']
    #allocation3 [shape = 's32[1]{0}', space=sflag, size = 0x4, scoped, tag = 'scoped memory for tpu_custom_call.1']
    %7 = vsyncpa [#allocation3], 0
    // Predicated region
    $region2: #{tpu_custom_call.1} parent=1 // pred_check
      _
    $region3: #{tpu_custom_call.1} parent=1 // pred_check_branch
      %9 = sbr.rel (0) target = $region5
    $region4: #{tpu_custom_call.1} parent=1 // pred_region
      _
    $region5: #{tpu_custom_call.1} parent=1 // pred_fallthru
      _
    // Predicated region
    $region6: #{tpu_custom_call.1} parent=1 // pred_check
      _
    $region7: #{tpu_custom_call.1} parent=1 // pred_check_branch
      %11 = sbr.rel (0) target = $region9
    $region8: #{tpu_custom_call.1} parent=1 // pred_region
      _
    $region9: #{tpu_custom_call.1} parent=1 // pred_fallthru
      _
    %v12 = vld [vmem:[%s0] sm:$0xff]
    %v13 = vld [vmem:[%s1] sm:$0xff]
    %s14 = smul.u32 0, 8
    %v15 = vlaneseq
    %v16 = vshrl.u32 %v15, 7
    %v17 = vstv %s14
    %v18 = vadd.s32 %v17, %v16
    %vm19 = vcmp.lt.s32.totalorder %v18, 8
    %s20 = smul.u32 0, 32
    %v21 = vstv %s20
    %v22 = vsub.s32 %v13, %v21
    %v23 = vsel %vm19, %v22, 4294967295
    %v24 = vlaneseq
    %v25 = vand.u32 %v24, 127
    %26 = vset.pattern.permute.xlu0 0
    %27 = vperm.xlu0 %26, %v23
    %v28 = vpop.permute.xlu0 %27
    %vm29 = vcmp.eq.s32.totalorder %v25, %v28
    %p30 = scmp.eq.s32.totalorder 0, 0
    // Predicated region
    $region10: #{tpu_custom_call.1} parent=1 // pred_check
      %p31 = pneg %p30
    $region11: #{tpu_custom_call.1} parent=1 // pred_check_branch
      %33 = sbr.rel (%p31) target = $region13
    $region12: #{tpu_custom_call.1} parent=1 // pred_region
      %34 = vst [vmem:[#allocation2] sm:$0xff] 0.0
    $region13: #{tpu_custom_call.1} parent=1 // pred_fallthru
      _
    %v35 = vsel %vm29, %v12, 0.0
    %vm36 = vcmask 261120
    %v37 = vsel %vm36, %v35, 0.0
    %38 = vadd.xlane.f32.xlu0 %v37
    %v39 = vpop.xlane.xlu0 %38
    %v40 = vld [vmem:[#allocation2] sm:$0xff]
    %vm41 = vcmask 7168
    %v42 = vsel %vm41, %v39, 0.0
    %43 = vadd.xlane.f32.xlu0 %v42
    %v44 = vpop.xlane.xlu0 %43
    %v45 = vrot.slane %v44, 4
    %v46 = vadd.f32 %v44, %v45
    %v47 = vrot.slane %v46, 2
    %v48 = vadd.f32 %v46, %v47
    %v49 = vrot.slane %v48, 1
    %v50 = vadd.f32 %v48, %v49
    %s51 = vtos %v50
    %v52 = vstv %s51
    %v53 = vadd.f32 %v40, %v52
    %54 = vst [vmem:[#allocation2] sm:$0xff] %v53
    // Predicated region
    $region14: #{tpu_custom_call.1} parent=1 // pred_check
      _
    $region15: #{tpu_custom_call.1} parent=1 // pred_check_branch
      %56 = sbr.rel (0) target = $region17
    $region16: #{tpu_custom_call.1} parent=1 // pred_region
      %s58 = ssub.s32 128, 128
      %59 = vsyncadd [#allocation3], %s58
      %s61 = sshll.u32 [#allocation2], 4
      %s62 = int_to_ptr.vmem [resolvable:$true] %s61
      %64 = dma.vmem_to_hbm [thread:$0]  %s62, 128, %s2, [#allocation3]
    $region17: #{tpu_custom_call.1} parent=1 // pred_fallthru
      _
    // Predicated region
    $region18: #{tpu_custom_call.1} parent=1 // pred_check
      _
    $region19: #{tpu_custom_call.1} parent=1 // pred_check_branch
      %66 = sbr.rel (0) target = $region21
    $region20: #{tpu_custom_call.1} parent=1 // pred_region
      %67 = dma.done [#allocation3], 128
    $region21: #{tpu_custom_call.1} parent=1 // pred_fallthru
      _
    %68 = vsyncpa [#allocation3], 1

</llo_original>
